<compile_context>
chip_gen: v7x
topology: tpu7x:2x2x1
jax: 0.10.0
libtpu: 0.0.40
codegen_flags: <defaults>
</compile_context>

<pallas_src>
import functools

import jax
import jax.numpy as jnp
from jax.experimental import pallas as pl
from jax.experimental.pallas import tpu as pltpu

LANES = 128
MAX_TILE_ROWS = 8192            # (8192, 128) f32 = 4 MiB per input block
SMALL_INPUT_BYTES = 1 << 20     # below this, plain XLA wins over kernel dispatch


def _round_up(x, m):
    return (x + m - 1) // m * m


def _sublane_multiple(dtype):
    # f32 -> 8 sublanes, bf16/f16 -> 16, 1-byte dtypes -> 32 (packed vreg tiling).
    return max(8, 32 // jnp.dtype(dtype).itemsize)


def _num_tensorcores():
    """2 TensorCores per chip on v7x, 1 on v5e/v6e."""
    try:
        kind = jax.devices()[0].device_kind.lower()
    except Exception:
        return 1
    return 2 if "v7" in kind else 1


def _block_reduce(x, tile_rows):
    # (tile_rows, 128) -> (1, 8, 128): vreg-wise VPU adds only; the cross-lane
    # reduction to a scalar happens once, in the wrapper.
    return x.reshape(tile_rows // 8, 8, LANES).sum(axis=0).reshape(1, 8, LANES)


def _mse_partial_kernel(p_ref, t_ref, out_ref, *, tile_rows, steps_per_core,
                        rows_valid, needs_mask):
    """Accumulate this core's partial sum((p - t)^2) into a (1, 8, 128) block."""
    c = pl.program_id(0)   # core axis (CORE_PARALLEL on v7x, size 1 elsewhere)
    j = pl.program_id(1)   # sequential reduction axis

    @pl.when(j == 0)
    def _():
        out_ref[...] = jnp.zeros_like(out_ref)

    p = p_ref[...]
    t = t_ref[...]
    if p.dtype != jnp.float32:   # static: no-op for f32 inputs
        p = p.astype(jnp.float32)
    if t.dtype != jnp.float32:
        t = t.astype(jnp.float32)
    d = p - t
    dsq = d * d

    if needs_mask:
        # Unclamped logical row offset of this step (the index_map clamps the
        # DMA, but the mask is derived from program ids so duplicates and the
        # last-block overhang are always zeroed).
        base_row = (c * steps_per_core + j) * tile_rows
        is_boundary = base_row + tile_rows > rows_valid

        @pl.when(jnp.logical_not(is_boundary))
        def _():
            out_ref[...] += _block_reduce(dsq, tile_rows)

        @pl.when(is_boundary)
        def _():
            row = jax.lax.broadcasted_iota(jnp.int32, (tile_rows, 1), 0) + base_row
            # Keep this a select (not a multiply) so garbage/NaN in the DMA
            # overhang is discarded, not propagated.
            masked = jnp.where(row < rows_valid, dsq, 0.0)
            out_ref[...] += _block_reduce(masked, tile_rows)
    else:
        out_ref[...] += _block_reduce(dsq, tile_rows)


@functools.partial(jax.jit, static_argnames=("force_pallas",))
def mse_loss(pred_y, target_y, *, force_pallas=False):
    assert pred_y.shape == target_y.shape
    out_dtype = jnp.result_type(pred_y.dtype, target_y.dtype)
    if not jnp.issubdtype(out_dtype, jnp.floating):
        out_dtype = jnp.dtype(jnp.float32)
    compute_dtype = out_dtype   # kernel reads inputs in native float dtype

    total = pred_y.size
    total_bytes = total * jnp.dtype(compute_dtype).itemsize

    # Tiny inputs: a fused XLA reduction is strictly faster than kernel dispatch.
    if total_bytes < SMALL_INPUT_BYTES and not force_pallas:
        d = pred_y.astype(jnp.float32) - target_y.astype(jnp.float32)
        return (jnp.sum(d * d) / jnp.float32(total)).astype(out_dtype)

    sub = _sublane_multiple(compute_dtype)
    n_lane_rows = pl.cdiv(total, LANES)
    rows_slab = _round_up(n_lane_rows, sub)

    def to_slab(x):
        flat = jnp.ravel(x)
        if flat.dtype != compute_dtype:   # only for mixed/int inputs
            flat = flat.astype(compute_dtype)
        pad = rows_slab * LANES - total
        if pad:
            # Ragged lane/sublane tail only: zero pad (adds nothing to the sum).
            flat = jnp.pad(flat, (0, pad))
        return flat.reshape(rows_slab, LANES)

    p2d = to_slab(pred_y)
    t2d = to_slab(target_y)

    num_cores = _num_tensorcores()
    tile_rows = min(MAX_TILE_ROWS, rows_slab)      # multiple of `sub` by construction
    n_blocks = pl.cdiv(rows_slab, tile_rows)
    steps_per_core = pl.cdiv(n_blocks, num_cores)
    needs_mask = num_cores * steps_per_core * tile_rows != rows_slab

    def in_index_map(c, j):
        # Clamp so the DMA never targets a fully out-of-bounds block; the
        # in-kernel mask (based on the *unclamped* index) zeroes duplicates
        # and the last-block overhang.
        return (jnp.minimum(c * steps_per_core + j, n_blocks - 1), 0)

    kernel = functools.partial(
        _mse_partial_kernel,
        tile_rows=tile_rows,
        steps_per_core=steps_per_core,
        rows_valid=rows_slab,
        needs_mask=needs_mask,
    )

    if num_cores > 1:
        # Real 2-TensorCore split on v7x; fall back to "parallel" if the enum
        # is unavailable in this jax build.
        dim_sems = (getattr(pltpu, "CORE_PARALLEL", "parallel"), "arbitrary")
    else:
        dim_sems = ("arbitrary", "arbitrary")

    partials = pl.pallas_call(
        kernel,
        out_shape=jax.ShapeDtypeStruct((num_cores, 8, LANES), jnp.float32),
        grid_spec=pltpu.PrefetchScalarGridSpec(
            num_scalar_prefetch=0,
            grid=(num_cores, steps_per_core),
            in_specs=[
                pl.BlockSpec((tile_rows, LANES), in_index_map),
                pl.BlockSpec((tile_rows, LANES), in_index_map),
            ],
            out_specs=pl.BlockSpec((1, 8, LANES), lambda c, j: (c, 0, 0)),
        ),
        compiler_params=pltpu.CompilerParams(
            dimension_semantics=dim_sems,
            vmem_limit_bytes=32 * 1024 * 1024,
        ),
    )(p2d, t2d)

    # Final tiny reduction (num_cores*8*128 partial bins) + mean normalization.
    return (jnp.sum(partials) / jnp.float32(total)).astype(out_dtype)


if __name__ == "__main__":
    key = jax.random.PRNGKey(0)
    k1, k2, k3, k4, k5, k6 = jax.random.split(key, 6)

    # 1) Small demo shape from the module spec; force the Pallas path so the
    #    kernel itself is exercised (the wrapper would otherwise take the
    #    small-input XLA fast path).
    pred_s = jax.random.normal(k1, (2, 4, 16, 16), dtype=jnp.float32)
    targ_s = jax.random.normal(k2, (2, 4, 16, 16), dtype=jnp.float32)
    loss_s = mse_loss(pred_s, targ_s, force_pallas=True)
    jax.block_until_ready(loss_s)
    ref_s = jnp.mean((pred_s - targ_s) ** 2)
    assert jnp.allclose(loss_s, ref_s, rtol=1e-5, atol=1e-6), (loss_s, ref_s)

    # 2) Larger f32 input that takes the Pallas path naturally (4096-row slab).
    pred_m = jax.random.normal(k3, (32, 4, 64, 64), dtype=jnp.float32)
    targ_m = jax.random.normal(k4, (32, 4, 64, 64), dtype=jnp.float32)
    loss_m = mse_loss(pred_m, targ_m)
    jax.block_until_ready(loss_m)
    ref_m = jnp.mean((pred_m - targ_m) ** 2)
    assert jnp.allclose(loss_m, ref_m, rtol=1e-5, atol=1e-6), (loss_m, ref_m)

    # 3) Ragged bf16 input: exercises the native-bf16 (no wrapper upcast) path,
    #    lane/sublane zero-padding and the gated tail mask.
    pred_r = jax.random.normal(k5, (3, 5, 37, 29), dtype=jnp.bfloat16)
    targ_r = jax.random.normal(k6, (3, 5, 37, 29), dtype=jnp.bfloat16)
    loss_r = mse_loss(pred_r, targ_r, force_pallas=True)
    jax.block_until_ready(loss_r)
    ref_r = jnp.mean(
        (pred_r.astype(jnp.float32) - targ_r.astype(jnp.float32)) ** 2)
    assert jnp.allclose(loss_r.astype(jnp.float32), ref_r,
                        rtol=2e-2, atol=1e-3), (loss_r, ref_r)

    print("KERNEL_OK")
</pallas_src>

<mosaic_0001>
module attributes {stable_mosaic.version = 11 : i64} {
  func.func @_mse_partial_kernel(%arg0: i32, %arg1: i32, %arg2: memref<16x128xf32, #tpu.memory_space<vmem>>, %arg3: memref<16x128xf32, #tpu.memory_space<vmem>>, %arg4: memref<1x8x128xf32, #tpu.memory_space<vmem>>) attributes {dimension_semantics = [#tpu.dimension_semantics<arbitrary>, #tpu.dimension_semantics<arbitrary>], iteration_bounds = array<i64: 1, 1>, scalar_prefetch = 0 : i64, scratch_operands = 0 : i64, tpu.core_type = #tpu.core_type<tc>, window_params = [{transform_indices = @transform_0, window_bounds = array<i64: 16, 128>}, {transform_indices = @transform_1, window_bounds = array<i64: 16, 128>}, {transform_indices = @transform_2, window_bounds = array<i64: 1, 8, 128>}]} {
    %c0_i32 = arith.constant 0 : i32
    %0 = arith.cmpi eq, %arg1, %c0_i32 : i32
    %1 = arith.extui %0 : i1 to i32
    %c0_i32_0 = arith.constant 0 : i32
    %2 = arith.cmpi ne, %1, %c0_i32_0 : i32
    scf.if %2 {
      %cst_10 = arith.constant 0.000000e+00 : f32
      %13 = vector.broadcast %cst_10 : f32 to vector<1x8x128xf32>
      %c0_11 = arith.constant 0 : index
      %c0_12 = arith.constant 0 : index
      %c0_13 = arith.constant 0 : index
      %14 = vector.load %arg4[%c0_11, %c0_12, %c0_13] : memref<1x8x128xf32, #tpu.memory_space<vmem>>, vector<1x8x128xf32>
      tpu.vector_store %arg4[%c0_11, %c0_12, %c0_13], %13 {strides = array<i32>} : memref<1x8x128xf32, #tpu.memory_space<vmem>>, vector<1x8x128xf32>,
    } else {
    }
    %c0 = arith.constant 0 : index
    %c0_1 = arith.constant 0 : index
    %3 = vector.load %arg2[%c0, %c0_1] : memref<16x128xf32, #tpu.memory_space<vmem>>, vector<16x128xf32>
    %c0_2 = arith.constant 0 : index
    %c0_3 = arith.constant 0 : index
    %4 = vector.load %arg3[%c0_2, %c0_3] : memref<16x128xf32, #tpu.memory_space<vmem>>, vector<16x128xf32>
    %5 = arith.subf %3, %4 : vector<16x128xf32>
    %6 = arith.mulf %5, %5 : vector<16x128xf32>
    %c0_4 = arith.constant 0 : index
    %c0_5 = arith.constant 0 : index
    %c0_6 = arith.constant 0 : index
    %7 = vector.load %arg4[%c0_4, %c0_5, %c0_6] : memref<1x8x128xf32, #tpu.memory_space<vmem>>, vector<1x8x128xf32>
    %8 = vector.shape_cast %6 : vector<16x128xf32> to vector<2x8x128xf32>
    %cst = arith.constant dense<0.000000e+00> : vector<8x128xf32>
    %9 = vector.multi_reduction <add>, %8, %cst [0] : vector<2x8x128xf32> to vector<8x128xf32>
    %10 = vector.shape_cast %9 : vector<8x128xf32> to vector<1x8x128xf32>
    %11 = arith.addf %7, %10 : vector<1x8x128xf32>
    %c0_7 = arith.constant 0 : index
    %c0_8 = arith.constant 0 : index
    %c0_9 = arith.constant 0 : index
    %12 = vector.load %arg4[%c0_7, %c0_8, %c0_9] : memref<1x8x128xf32, #tpu.memory_space<vmem>>, vector<1x8x128xf32>
    tpu.vector_store %arg4[%c0_7, %c0_8, %c0_9], %11 {strides = array<i32>} : memref<1x8x128xf32, #tpu.memory_space<vmem>>, vector<1x8x128xf32>,
    return
  }
  func.func @transform_0(%arg0: i32, %arg1: i32) -> (i32, i32) {
    %c1_i32 = arith.constant 1 : i32
    %0 = arith.muli %arg0, %c1_i32 : i32
    %1 = arith.addi %0, %arg1 : i32
    %c0_i32 = arith.constant 0 : i32
    %2 = arith.minsi %1, %c0_i32 : i32
    %c0_i32_0 = arith.constant 0 : i32
    %c0_i32_1 = arith.constant 0 : i32
    return %2, %c0_i32_0 : i32, i32
  }
  func.func @transform_1(%arg0: i32, %arg1: i32) -> (i32, i32) {
    %c1_i32 = arith.constant 1 : i32
    %0 = arith.muli %arg0, %c1_i32 : i32
    %1 = arith.addi %0, %arg1 : i32
    %c0_i32 = arith.constant 0 : i32
    %2 = arith.minsi %1, %c0_i32 : i32
    %c0_i32_0 = arith.constant 0 : i32
    %c0_i32_1 = arith.constant 0 : i32
    return %2, %c0_i32_0 : i32, i32
  }
  func.func @transform_2(%arg0: i32, %arg1: i32) -> (i32, i32, i32) {
    %c0_i32 = arith.constant 0 : i32
    %c0_i32_0 = arith.constant 0 : i32
    %c0_i32_1 = arith.constant 0 : i32
    return %arg0, %c0_i32, %c0_i32_0 : i32, i32, i32
  }
}

</mosaic_0001>

<llo_original>
// kernel: mse_loss.1
$region0: #{mse_loss.1}
  #allocation0 [shape = 'u32[]', space=smem, size = 0x4, offset = 0x4, fixed_abs, tag = 'smem constant byte address 0x4 - core index']
  #allocation1 [shape = 'u32[144,128]{1,0:T(1,128)}', space=vmem, size = 0x12000, scoped, tag = 'internal scratch']
  %s0 = inlined_call_operand.vmem [shape: f32[16,128], index: 0, kind: input, shape index: {}]
  %s1 = inlined_call_operand.vmem [shape: f32[16,128], index: 1, kind: input, shape index: {}]
  %s2 = inlined_call_operand.vmem [shape: f32[1,8,128], index: 2, kind: output, shape index: {}]
  %s3 = sld [smem:[#allocation0]]
  $region22: #{mse_loss.1} parent=0
    _
  %s5 = ssub.s32 1, %s3
  %s6 = scalar_select 0, %s5, %s3
  // Predicated region
  $region2: #{mse_loss.1} parent=0 // pred_check
    _
  $region3: #{mse_loss.1} parent=0 // pred_check_branch
    %8 = sbr.rel (0) target = $region5
  $region4: #{mse_loss.1} parent=0 // pred_region
    %s9 = sadd.s32 0, 0
    %p10 = scmp.lt.s32.totalorder %s9, 0
    %s11 = scalar_select %p10, %s9, 0
    %s12 = smul.u32 2, %s11
    %p13 = scmp.lt.s32.totalorder %s12, 1
    %s14 = scalar_select %p13, %s12, 1
    %s15 = smul.addr %s14, 8
    %s16 = scalar_lea.vmem %s0, %s15
    %s17 = sadd.s32 0, 0
    %p18 = scmp.lt.s32.totalorder %s17, 0
    %s19 = scalar_select %p18, %s17, 0
    %s20 = smul.u32 2, %s19
  $region5: #{mse_loss.1} parent=0 // pred_fallthru
    _
  // Predicated region
  $region6: #{mse_loss.1} parent=0 // pred_check
    _
  $region7: #{mse_loss.1} parent=0 // pred_check_branch
    %22 = sbr.rel (0) target = $region9
  $region8: #{mse_loss.1} parent=0 // pred_region
    %s23 = sadd.s32 0, 0
    %p24 = scmp.lt.s32.totalorder %s23, 0
    %s25 = scalar_select %p24, %s23, 0
    %s26 = smul.u32 2, %s25
    %p27 = scmp.lt.s32.totalorder %s26, 1
    %s28 = scalar_select %p27, %s26, 1
    %s29 = smul.addr %s28, 8
    %s30 = scalar_lea.vmem %s1, %s29
    %s31 = sadd.s32 0, 0
    %p32 = scmp.lt.s32.totalorder %s31, 0
    %s33 = scalar_select %p32, %s31, 0
    %s34 = smul.u32 2, %s33
  $region9: #{mse_loss.1} parent=0 // pred_fallthru
    _
  %s35 = sadd.s32 0, 0
  %p36 = scmp.lt.s32.totalorder %s35, 0
  %s37 = scalar_select %p36, %s35, 0
  %s38 = smul.u32 2, %s37
  %p39 = scmp.lt.s32.totalorder %s38, 1
  %s40 = scalar_select %p39, %s38, 1
  %s41 = smul.addr %s40, 8
  %s42 = scalar_lea.vmem %s0, %s41
  %s43 = sadd.s32 0, 0
  %p44 = scmp.lt.s32.totalorder %s43, 0
  %s45 = scalar_select %p44, %s43, 0
  %s46 = smul.u32 2, %s45
  %p47 = scmp.lt.s32.totalorder %s46, 1
  %s48 = scalar_select %p47, %s46, 1
  %s49 = smul.addr %s48, 8
  %s50 = scalar_lea.vmem %s1, %s49
  %s51 = sadd.s32 0, 0
  %p52 = scmp.lt.s32.totalorder %s51, 0
  %s53 = scalar_select %p52, %s51, 0
  %s54 = smul.u32 2, %s53
  %p55 = scmp.lt.s32.totalorder %s54, 1
  %s56 = scalar_select %p55, %s54, 1
  %s57 = smul.addr %s56, 8
  %s58 = scalar_lea.vmem %s0, %s57
  %s59 = sadd.s32 0, 0
  %p60 = scmp.lt.s32.totalorder %s59, 0
  %s61 = scalar_select %p60, %s59, 0
  %s62 = smul.u32 2, %s61
  %s63 = sadd.s32 0, 0
  %p64 = scmp.lt.s32.totalorder %s63, 0
  %s65 = scalar_select %p64, %s63, 0
  %s66 = smul.u32 2, %s65
  %p67 = scmp.lt.s32.totalorder %s66, 1
  %s68 = scalar_select %p67, %s66, 1
  %s69 = smul.addr %s68, 8
  %s70 = scalar_lea.vmem %s1, %s69
  %s71 = sadd.s32 0, 0
  %p72 = scmp.lt.s32.totalorder %s71, 0
  %s73 = scalar_select %p72, %s71, 0
  %s74 = smul.u32 2, %s73
  %p75 = scmp.eq.s32.totalorder 0, 0
  // Predicated region
  $region10: #{mse_loss.1} parent=0 // pred_check
    %p76 = pneg %p75
  $region11: #{mse_loss.1} parent=0 // pred_check_branch
    %78 = sbr.rel (%p76) target = $region13
  $region12: #{mse_loss.1} parent=0 // pred_region
    %79 = vst [vmem:[%s2] sm:$0xff] 0.0
  $region13: #{mse_loss.1} parent=0 // pred_fallthru
    _
  %v80 = vld [vmem:[%s58] sm:$0xff]
  %v81 = vld [vmem:[%s58 + $0x8] sm:$0xff]
  %v82 = vld [vmem:[%s70] sm:$0xff]
  %v83 = vld [vmem:[%s70 + $0x8] sm:$0xff]
  %v84 = vsub.f32 %v80, %v82
  %v85 = vsub.f32 %v81, %v83
  %v86 = vmul.f32 %v84, %v84
  %v87 = vmul.f32 %v85, %v85
  %v88 = vld [vmem:[%s2] sm:$0xff]
  %v89 = vadd.f32 %v86, %v87
  %v90 = vadd.f32 %v88, %v89
  %91 = vst [vmem:[%s2] sm:$0xff] %v90
  // Predicated region
  $region14: #{mse_loss.1} parent=0 // pred_check
    _
  $region15: #{mse_loss.1} parent=0 // pred_check_branch
    %93 = sbr.rel (0) target = $region17
  $region16: #{mse_loss.1} parent=0 // pred_region
    _
  $region17: #{mse_loss.1} parent=0 // pred_fallthru
    _
  // Predicated region
  $region18: #{mse_loss.1} parent=0 // pred_check
    _
  $region19: #{mse_loss.1} parent=0 // pred_check_branch
    %95 = sbr.rel (0) target = $region21
  $region20: #{mse_loss.1} parent=0 // pred_region
    _
  $region21: #{mse_loss.1} parent=0 // pred_fallthru
    _

</llo_original>
